<compile_context>
chip_gen: v5e
topology: v5e:2x2
jax: 0.10.0
libtpu: 0.0.40
codegen_flags: <defaults>
</compile_context>

<pallas_src>
import functools

import jax
import jax.numpy as jnp
from jax.experimental import pallas as pl
from jax.experimental.pallas import tpu as pltpu


def conv_block_kernel(xpad_hbm, v_ref,
                      w12_ref, b12_ref, w34_ref, b34_ref,
                      ox_ref, ov_ref,
                      xbuf, sem,
                      *, dilation, tile_l, halo_l, cp, compute_dtype):
    n = pl.program_id(0)          # batch index  ("parallel": chain self-contained per batch)
    j = pl.program_id(1)          # L-tile index ("arbitrary": carries the halo-DMA prefetch chain)
    nt = pl.num_programs(1)

    def copy_in(tile, slot):
        # Halo tile of the zero-padded input: rows [tile*TL, tile*TL + TL + 2*d) of batch n.
        row0 = pl.multiple_of(tile * tile_l, 8)      # tile_l is always a multiple of 8
        return pltpu.make_async_copy(
            xpad_hbm.at[n, pl.ds(row0, halo_l), :],
            xbuf.at[slot],
            sem.at[slot])

    slot = j & 1

    @pl.when(j == 0)
    def _():
        copy_in(0, 0).start()                        # prime: first tile of this batch element

    @pl.when(j + 1 < nt)
    def _():
        copy_in(j + 1, 1 - slot).start()             # prefetch next L-tile's halo

    copy_in(j, slot).wait()

    x_full = xbuf[slot]                              # (halo_l, cp) f32: exact residual source
    xc = x_full.astype(compute_dtype)                # bf16 (or f32) MXU operand

    # Fused dilated k=3 conv: stack the 3 shifted taps along lanes -> one wide matmul.
    # NOTE: for dilation % 8 != 0 two of these slices are sublane-misaligned (cheap XLU shifts).
    xcat = jnp.concatenate(
        [xc[k * dilation:k * dilation + tile_l, :] for k in range(3)], axis=-1)  # (TL, 3cp)
    acc = jnp.dot(xcat, w12_ref[...], preferred_element_type=jnp.float32)        # (TL, 2cp) f32

    gates = jnp.tanh(acc + b12_ref[...])             # bias added once, f32 tanh (EUP)
    y = gates[:, :cp] * gates[:, cp:]                # gated activation

    # Fused 1x1 convs (conv3 | conv4).
    ab = jnp.dot(y.astype(compute_dtype), w34_ref[...],
                 preferred_element_type=jnp.float32) + b34_ref[...]

    x_res = x_full[dilation:dilation + tile_l, :]    # residual = unpadded x rows of this tile
    ox_ref[0] = (x_res + ab[:, :cp]).astype(ox_ref.dtype)
    ov_ref[0] = (v_ref[0] + ab[:, cp:]).astype(ov_ref.dtype)


def _round_up(x, m):
    return ((x + m - 1) // m) * m


def _vmem_limit_bytes():
    """Generation-aware VMEM limit with headroom below physical capacity."""
    cap = 128 * 1024 * 1024
    try:
        cap = int(getattr(pltpu.get_tpu_info(), "vmem_capacity_bytes", cap))
    except Exception:
        pass
    # 48 MiB on 64-MiB v7x parts, 96 MiB on 128-MiB v5e/v6e parts.
    return min((cap * 3) // 4, 96 * 1024 * 1024)


def _pick_tile_l(L, cp, dilation, weight_bytes, vmem_limit):
    """Largest multiple-of-8 L-tile whose pipelined buffers + temporaries fit the budget."""
    # Leave half the limit for Mosaic internal scratch / pipeline slack, then subtract the
    # resident (double-buffered) weights and the constant halo extension of both x slots.
    budget = max(vmem_limit // 2 - weight_bytes - 2 * (2 * dilation) * cp * 4,
                 2 * 1024 * 1024)
    # Per-output-row live bytes: 2x halo slot (f32) + v in (x2 buf) + 2 outputs (x2 buf each)
    # + bf16 xcat (3cp) + f32 acc/gates (2cp) + y (cp) + ab (2cp)  ->  ~62*cp, rounded up.
    bytes_per_row = 72 * cp
    cap_rows = max(8, (budget // bytes_per_row) // 8 * 8)
    target = 2048 if vmem_limit >= 64 * 1024 * 1024 else 1024
    return max(8, min(_round_up(L, 8), min(cap_rows, target)))


def conv_block_forward(x_ncl, v_ncl, params, scale, compute_dtype=jnp.bfloat16):
    """x_ncl, v_ncl: (N, C, L) float32 (PyTorch NCL). Returns (x + conv3(y), v + conv4(y)) in NCL."""
    w1t, b1, w2t, b2, w3t, b3, w4t, b4 = params
    N, C, L = x_ncl.shape
    d = int(scale)

    cp = _round_up(max(C, 1), 128)        # lane-dense channel padding
    pc = cp - C

    # torch (C_out, C_in, K) -> matmul layout, zero-pad channels, fuse weight pairs.
    def prep3(w):
        w = jnp.transpose(w, (2, 1, 0))                   # (3, C_in, C_out)
        return jnp.pad(w, ((0, 0), (0, pc), (0, pc)))

    def prep1(w):
        w = jnp.transpose(w[:, :, 0], (1, 0))             # (C_in, C_out)
        return jnp.pad(w, ((0, pc), (0, pc)))

    def prepb(b):
        return jnp.pad(b, ((0, pc),))

    # conv1|conv2 fused along output channels; taps flattened into the contraction dim.
    w12 = jnp.concatenate([prep3(w1t), prep3(w2t)], axis=2)             # (3, cp, 2cp)
    w12 = w12.reshape(3 * cp, 2 * cp).astype(compute_dtype)             # (3cp, 2cp)
    b12 = jnp.concatenate([prepb(b1), prepb(b2)])[None, :].astype(jnp.float32)     # (1, 2cp)
    w34 = jnp.concatenate([prep1(w3t), prep1(w4t)], axis=1).astype(compute_dtype)  # (cp, 2cp)
    b34 = jnp.concatenate([prepb(b3), prepb(b4)])[None, :].astype(jnp.float32)     # (1, 2cp)

    vmem_limit = _vmem_limit_bytes()
    wbytes = 2 * (w12.size * w12.dtype.itemsize + w34.size * w34.dtype.itemsize
                  + b12.size * 4 + b34.size * 4)          # x2: default double-buffered residents
    tile_l = _pick_tile_l(L, cp, d, wbytes, vmem_limit)
    num_lt = pl.cdiv(L, tile_l)
    lpad = num_lt * tile_l                                # ragged tail handled by padding
    halo_l = tile_l + 2 * d

    # NCL -> NLC, channel pad to cp, length pad by d (dilated-conv halo) + ragged tail (fused
    # into one XLA transpose+pad materialization).
    xpad = jnp.pad(jnp.transpose(x_ncl, (0, 2, 1)),
                   ((0, 0), (d, d + (lpad - L)), (0, pc)))              # (N, lpad+2d, cp)
    v = jnp.pad(jnp.transpose(v_ncl, (0, 2, 1)),
                ((0, 0), (0, lpad - L), (0, pc)))                       # (N, lpad, cp)

    kernel = functools.partial(conv_block_kernel, dilation=d, tile_l=tile_l,
                               halo_l=halo_l, cp=cp, compute_dtype=compute_dtype)

    ox, ov = pl.pallas_call(
        kernel,
        out_shape=(jax.ShapeDtypeStruct((N, lpad, cp), x_ncl.dtype),
                   jax.ShapeDtypeStruct((N, lpad, cp), x_ncl.dtype)),
        grid=(N, num_lt),
        in_specs=[
            pl.BlockSpec(memory_space=pl.ANY),                          # xpad (manual halo DMA)
            pl.BlockSpec((1, tile_l, cp), lambda n, j: (n, j, 0)),      # v
            pl.BlockSpec((3 * cp, 2 * cp), lambda n, j: (0, 0)),        # w12 (resident)
            pl.BlockSpec((1, 2 * cp), lambda n, j: (0, 0)),             # b12
            pl.BlockSpec((cp, 2 * cp), lambda n, j: (0, 0)),            # w34
            pl.BlockSpec((1, 2 * cp), lambda n, j: (0, 0)),             # b34
        ],
        out_specs=(pl.BlockSpec((1, tile_l, cp), lambda n, j: (n, j, 0)),
                   pl.BlockSpec((1, tile_l, cp), lambda n, j: (n, j, 0))),
        scratch_shapes=[pltpu.VMEM((2, halo_l, cp), xpad.dtype),        # double-buffered halo
                        pltpu.SemaphoreType.DMA((2,))],
        compiler_params=pltpu.CompilerParams(
            dimension_semantics=("parallel", "arbitrary"),
            vmem_limit_bytes=vmem_limit),
    )(xpad, v, w12, b12, w34, b34)

    ox = jnp.transpose(ox[:, :L, :C], (0, 2, 1))
    ov = jnp.transpose(ov[:, :L, :C], (0, 2, 1))
    return ox, ov


# ---------------- pure-JAX reference (for correctness check) ----------------
def _conv1d_ref(x_ncl, w_oik, b, dilation, padding):
    out = jax.lax.conv_general_dilated(
        x_ncl, w_oik, window_strides=(1,), padding=[(padding, padding)],
        rhs_dilation=(dilation,), dimension_numbers=('NCH', 'OIH', 'NCH'))
    return out + b[None, :, None]


def conv_block_ref(x, v, params, scale):
    w1, b1, w2, b2, w3, b3, w4, b4 = params
    z = jnp.tanh(_conv1d_ref(x, w1, b1, scale, scale))
    w = jnp.tanh(_conv1d_ref(x, w2, b2, scale, scale))
    y = z * w
    a = _conv1d_ref(y, w3, b3, 1, 0)
    b = _conv1d_ref(y, w4, b4, 1, 0)
    return x + a, v + b


if __name__ == "__main__":
    key = jax.random.PRNGKey(0)
    N, C, L = 2, 4, 16
    scale = 2

    keys = jax.random.split(key, 10)
    x = jax.random.normal(keys[0], (N, C, L), jnp.float32)
    v = jax.random.normal(keys[1], (N, C, L), jnp.float32)

    # Deterministic parameter init (torch Conv1d weight layout: (C_out, C_in, K)).
    params = (
        0.2 * jax.random.normal(keys[2], (C, C, 3), jnp.float32),   # conv1.weight
        0.1 * jax.random.normal(keys[3], (C,), jnp.float32),        # conv1.bias
        0.2 * jax.random.normal(keys[4], (C, C, 3), jnp.float32),   # conv2.weight
        0.1 * jax.random.normal(keys[5], (C,), jnp.float32),        # conv2.bias
        0.2 * jax.random.normal(keys[6], (C, C, 1), jnp.float32),   # conv3.weight
        0.1 * jax.random.normal(keys[7], (C,), jnp.float32),        # conv3.bias
        0.2 * jax.random.normal(keys[8], (C, C, 1), jnp.float32),   # conv4.weight
        0.1 * jax.random.normal(keys[9], (C,), jnp.float32),        # conv4.bias
    )

    rx, rv = conv_block_ref(x, v, params, scale)

    # Default bf16 MXU path (loose tolerance: bf16 operand rounding).
    ox, ov = conv_block_forward(x, v, params, scale)
    jax.block_until_ready((ox, ov))
    assert jnp.allclose(ox, rx, atol=1.5e-1, rtol=5e-2), "x-branch mismatch (bf16)"
    assert jnp.allclose(ov, rv, atol=1.5e-1, rtol=5e-2), "v-branch mismatch (bf16)"

    # f32 MXU path (tight tolerance).
    ox32, ov32 = conv_block_forward(x, v, params, scale, compute_dtype=jnp.float32)
    jax.block_until_ready((ox32, ov32))
    assert jnp.allclose(ox32, rx, atol=1e-4, rtol=1e-4), "x-branch mismatch (f32)"
    assert jnp.allclose(ov32, rv, atol=1e-4, rtol=1e-4), "v-branch mismatch (f32)"

    # Ragged L (not a multiple of 8 / tile) exercises the padded-tail path.
    L2 = 13
    x2 = jax.random.normal(keys[0], (1, C, L2), jnp.float32)
    v2 = jax.random.normal(keys[1], (1, C, L2), jnp.float32)
    rx2, rv2 = conv_block_ref(x2, v2, params, 1)
    ox2, ov2 = conv_block_forward(x2, v2, params, 1)
    jax.block_until_ready((ox2, ov2))
    assert jnp.allclose(ox2, rx2, atol=1.5e-1, rtol=5e-2), "x-branch mismatch (ragged L)"
    assert jnp.allclose(ov2, rv2, atol=1.5e-1, rtol=5e-2), "v-branch mismatch (ragged L)"

    print("KERNEL_OK")
</pallas_src>

<mosaic_0001>
module attributes {stable_mosaic.version = 11 : i64} {
  func.func @conv_block_kernel(%arg0: i32, %arg1: i32, %arg2: memref<2x20x128xf32, #tpu.memory_space<any>>, %arg3: memref<1x16x128xf32, #tpu.memory_space<vmem>>, %arg4: memref<384x256xbf16, #tpu.memory_space<vmem>>, %arg5: memref<1x256xf32, #tpu.memory_space<vmem>>, %arg6: memref<128x256xbf16, #tpu.memory_space<vmem>>, %arg7: memref<1x256xf32, #tpu.memory_space<vmem>>, %arg8: memref<1x16x128xf32, #tpu.memory_space<vmem>>, %arg9: memref<1x16x128xf32, #tpu.memory_space<vmem>>, %arg10: memref<2x20x128xf32, #tpu.memory_space<vmem>>, %arg11: memref<2x!tpu.dma_semaphore, #tpu.memory_space<semaphore_mem>>) attributes {dimension_semantics = [#tpu.dimension_semantics<parallel>, #tpu.dimension_semantics<arbitrary>], iteration_bounds = array<i64: 2, 1>, scalar_prefetch = 0 : i64, scratch_operands = 2 : i64, tpu.core_type = #tpu.core_type<tc>, window_params = [{}, {transform_indices = @transform_1, window_bounds = array<i64: 1, 16, 128>}, {pipeline_mode = #tpu.pipeline_mode<synchronous>, transform_indices = @transform_2, window_bounds = array<i64: 384, 256>}, {pipeline_mode = #tpu.pipeline_mode<synchronous>, transform_indices = @transform_3, window_bounds = array<i64: 1, 256>}, {pipeline_mode = #tpu.pipeline_mode<synchronous>, transform_indices = @transform_4, window_bounds = array<i64: 128, 256>}, {pipeline_mode = #tpu.pipeline_mode<synchronous>, transform_indices = @transform_5, window_bounds = array<i64: 1, 256>}, {transform_indices = @transform_6, window_bounds = array<i64: 1, 16, 128>}, {transform_indices = @transform_7, window_bounds = array<i64: 1, 16, 128>}]} {
    %c1_i32 = arith.constant 1 : i32
    %0 = arith.andi %arg1, %c1_i32 : i32
    %c0_i32 = arith.constant 0 : i32
    %1 = arith.cmpi eq, %arg1, %c0_i32 : i32
    %2 = arith.extui %1 : i1 to i32
    %c0_i32_0 = arith.constant 0 : i32
    %3 = arith.cmpi ne, %2, %c0_i32_0 : i32
    scf.if %3 {
      %c0_i32_26 = arith.constant 0 : i32
      %52 = tpu.assume_multiple %c0_i32_26, 8 : i32
      %c0_i32_27 = arith.constant 0 : i32
      %c0_i32_28 = arith.constant 0 : i32
      %c0_i32_29 = arith.constant 0 : i32
      %53 = tpu.memref_slice %arg2[%arg0, %52, %c0_i32_29] : memref<2x20x128xf32, #tpu.memory_space<any>> -> memref<1x20x128xf32, #tpu.memory_space<any>>
      %54 = tpu.memref_squeeze %53 : memref<1x20x128xf32, #tpu.memory_space<any>> -> memref<20x128xf32, #tpu.memory_space<any>>
      %c0_i32_30 = arith.constant 0 : i32
      %c0_i32_31 = arith.constant 0 : i32
      %55 = tpu.memref_slice %arg10[%c0_i32_27, %c0_i32_30, %c0_i32_31] : memref<2x20x128xf32, #tpu.memory_space<vmem>> -> memref<1x20x128xf32, #tpu.memory_space<vmem>>
      %56 = tpu.memref_squeeze %55 : memref<1x20x128xf32, #tpu.memory_space<vmem>> -> memref<20x128xf32, #tpu.memory_space<vmem>>
      %57 = tpu.memref_slice %arg11[%c0_i32_28] : memref<2x!tpu.dma_semaphore, #tpu.memory_space<semaphore_mem>> -> memref<1x!tpu.dma_semaphore, #tpu.memory_space<semaphore_mem>>
      %58 = tpu.memref_squeeze %57 : memref<1x!tpu.dma_semaphore, #tpu.memory_space<semaphore_mem>> -> memref<!tpu.dma_semaphore, #tpu.memory_space<semaphore_mem>>
      tpu.enqueue_dma source(%54 : memref<20x128xf32, #tpu.memory_space<any>>) target(%56 : memref<20x128xf32, #tpu.memory_space<vmem>>) target_semaphore(%58 : memref<!tpu.dma_semaphore, #tpu.memory_space<semaphore_mem>>)
    } else {
    }
    %c1_i32_1 = arith.constant 1 : i32
    %4 = arith.addi %arg1, %c1_i32_1 : i32
    %c1_i32_2 = arith.constant 1 : i32
    %5 = arith.cmpi slt, %4, %c1_i32_2 : i32
    %6 = arith.extui %5 : i1 to i32
    %c0_i32_3 = arith.constant 0 : i32
    %7 = arith.cmpi ne, %6, %c0_i32_3 : i32
    scf.if %7 {
      %c1_i32_26 = arith.constant 1 : i32
      %52 = arith.addi %arg1, %c1_i32_26 : i32
      %c1_i32_27 = arith.constant 1 : i32
      %53 = arith.subi %c1_i32_27, %0 : i32
      %c16_i32_28 = arith.constant 16 : i32
      %54 = arith.muli %52, %c16_i32_28 : i32
      %55 = tpu.assume_multiple %54, 8 : i32
      %c0_i32_29 = arith.constant 0 : i32
      %56 = tpu.memref_slice %arg2[%arg0, %55, %c0_i32_29] : memref<2x20x128xf32, #tpu.memory_space<any>> -> memref<1x20x128xf32, #tpu.memory_space<any>>
      %57 = tpu.memref_squeeze %56 : memref<1x20x128xf32, #tpu.memory_space<any>> -> memref<20x128xf32, #tpu.memory_space<any>>
      %c0_i32_30 = arith.constant 0 : i32
      %c0_i32_31 = arith.constant 0 : i32
      %58 = tpu.memref_slice %arg10[%53, %c0_i32_30, %c0_i32_31] : memref<2x20x128xf32, #tpu.memory_space<vmem>> -> memref<1x20x128xf32, #tpu.memory_space<vmem>>
      %59 = tpu.memref_squeeze %58 : memref<1x20x128xf32, #tpu.memory_space<vmem>> -> memref<20x128xf32, #tpu.memory_space<vmem>>
      %60 = tpu.memref_slice %arg11[%53] : memref<2x!tpu.dma_semaphore, #tpu.memory_space<semaphore_mem>> -> memref<1x!tpu.dma_semaphore, #tpu.memory_space<semaphore_mem>>
      %61 = tpu.memref_squeeze %60 : memref<1x!tpu.dma_semaphore, #tpu.memory_space<semaphore_mem>> -> memref<!tpu.dma_semaphore, #tpu.memory_space<semaphore_mem>>
      tpu.enqueue_dma source(%57 : memref<20x128xf32, #tpu.memory_space<any>>) target(%59 : memref<20x128xf32, #tpu.memory_space<vmem>>) target_semaphore(%61 : memref<!tpu.dma_semaphore, #tpu.memory_space<semaphore_mem>>)
    } else {
    }
    %c16_i32 = arith.constant 16 : i32
    %8 = arith.muli %arg1, %c16_i32 : i32
    %9 = tpu.assume_multiple %8, 8 : i32
    %c0_i32_4 = arith.constant 0 : i32
    %10 = tpu.memref_slice %arg2[%arg0, %9, %c0_i32_4] : memref<2x20x128xf32, #tpu.memory_space<any>> -> memref<1x20x128xf32, #tpu.memory_space<any>>
    %11 = tpu.memref_squeeze %10 : memref<1x20x128xf32, #tpu.memory_space<any>> -> memref<20x128xf32, #tpu.memory_space<any>>
    %c0_i32_5 = arith.constant 0 : i32
    %c0_i32_6 = arith.constant 0 : i32
    %12 = tpu.memref_slice %arg10[%0, %c0_i32_5, %c0_i32_6] : memref<2x20x128xf32, #tpu.memory_space<vmem>> -> memref<1x20x128xf32, #tpu.memory_space<vmem>>
    %13 = tpu.memref_squeeze %12 : memref<1x20x128xf32, #tpu.memory_space<vmem>> -> memref<20x128xf32, #tpu.memory_space<vmem>>
    %14 = tpu.memref_slice %arg11[%0] : memref<2x!tpu.dma_semaphore, #tpu.memory_space<semaphore_mem>> -> memref<1x!tpu.dma_semaphore, #tpu.memory_space<semaphore_mem>>
    %15 = tpu.memref_squeeze %14 : memref<1x!tpu.dma_semaphore, #tpu.memory_space<semaphore_mem>> -> memref<!tpu.dma_semaphore, #tpu.memory_space<semaphore_mem>>
    tpu.wait_dma2 semaphore(%15 : memref<!tpu.dma_semaphore, #tpu.memory_space<semaphore_mem>>) src(%11 : memref<20x128xf32, #tpu.memory_space<any>>) dst(%13 : memref<20x128xf32, #tpu.memory_space<vmem>>)
    %16 = arith.index_cast %0 : i32 to index
    %c0 = arith.constant 0 : index
    %c0_7 = arith.constant 0 : index
    %17 = vector.load %arg10[%16, %c0, %c0_7] : memref<2x20x128xf32, #tpu.memory_space<vmem>>, vector<1x20x128xf32>
    %18 = vector.shape_cast %17 : vector<1x20x128xf32> to vector<20x128xf32>
    %19 = arith.truncf %18 : vector<20x128xf32> to vector<20x128xbf16>
    %20 = vector.extract_strided_slice %19 {offsets = [0, 0], sizes = [16, 128], strides = [1, 1]} : vector<20x128xbf16> to vector<16x128xbf16>
    %21 = vector.extract_strided_slice %19 {offsets = [2, 0], sizes = [16, 128], strides = [1, 1]} : vector<20x128xbf16> to vector<16x128xbf16>
    %22 = vector.extract_strided_slice %19 {offsets = [4, 0], sizes = [16, 128], strides = [1, 1]} : vector<20x128xbf16> to vector<16x128xbf16>
    %23 = tpu.concatenate %20, %21, %22 in 1 : vector<16x128xbf16>, vector<16x128xbf16>, vector<16x128xbf16> -> vector<16x384xbf16>
    %c0_8 = arith.constant 0 : index
    %c0_9 = arith.constant 0 : index
    %24 = vector.load %arg4[%c0_8, %c0_9] : memref<384x256xbf16, #tpu.memory_space<vmem>>, vector<384x256xbf16>
    %cst = arith.constant dense<0.000000e+00> : vector<16x256xf32>
    %25 = tpu.matmul %23, %24, %cst {dimension_numbers = #tpu.dot_dimension_numbers<[1], [0], [0], [1], [0, 0, 1, 1], [], []>} : vector<16x384xbf16>, vector<384x256xbf16>, vector<16x256xf32> -> vector<16x256xf32>
    %c0_10 = arith.constant 0 : index
    %c0_11 = arith.constant 0 : index
    %26 = vector.load %arg5[%c0_10, %c0_11] : memref<1x256xf32, #tpu.memory_space<vmem>>, vector<1x256xf32>
    %27 = vector.broadcast %26 : vector<1x256xf32> to vector<16x256xf32>
    %28 = arith.addf %25, %27 : vector<16x256xf32>
    %29 = math.tanh %28 : vector<16x256xf32>
    %30 = vector.extract_strided_slice %29 {offsets = [0, 0], sizes = [16, 128], strides = [1, 1]} : vector<16x256xf32> to vector<16x128xf32>
    %31 = vector.extract_strided_slice %29 {offsets = [0, 128], sizes = [16, 128], strides = [1, 1]} : vector<16x256xf32> to vector<16x128xf32>
    %32 = arith.mulf %30, %31 : vector<16x128xf32>
    %33 = arith.truncf %32 : vector<16x128xf32> to vector<16x128xbf16>
    %c0_12 = arith.constant 0 : index
    %c0_13 = arith.constant 0 : index
    %34 = vector.load %arg6[%c0_12, %c0_13] : memref<128x256xbf16, #tpu.memory_space<vmem>>, vector<128x256xbf16>
    %cst_14 = arith.constant dense<0.000000e+00> : vector<16x256xf32>
    %35 = tpu.matmul %33, %34, %cst_14 {dimension_numbers = #tpu.dot_dimension_numbers<[1], [0], [0], [1], [0, 0, 1, 1], [], []>} : vector<16x128xbf16>, vector<128x256xbf16>, vector<16x256xf32> -> vector<16x256xf32>
    %c0_15 = arith.constant 0 : index
    %c0_16 = arith.constant 0 : index
    %36 = vector.load %arg7[%c0_15, %c0_16] : memref<1x256xf32, #tpu.memory_space<vmem>>, vector<1x256xf32>
    %37 = vector.broadcast %36 : vector<1x256xf32> to vector<16x256xf32>
    %38 = arith.addf %35, %37 : vector<16x256xf32>
    %39 = vector.extract_strided_slice %18 {offsets = [2, 0], sizes = [16, 128], strides = [1, 1]} : vector<20x128xf32> to vector<16x128xf32>
    %40 = vector.extract_strided_slice %38 {offsets = [0, 0], sizes = [16, 128], strides = [1, 1]} : vector<16x256xf32> to vector<16x128xf32>
    %41 = arith.addf %39, %40 : vector<16x128xf32>
    %c0_17 = arith.constant 0 : index
    %c0_18 = arith.constant 0 : index
    %c0_19 = arith.constant 0 : index
    %42 = vector.load %arg8[%c0_17, %c0_18, %c0_19] : memref<1x16x128xf32, #tpu.memory_space<vmem>>, vector<1x16x128xf32>
    %43 = vector.shape_cast %42 : vector<1x16x128xf32> to vector<16x128xf32>
    %44 = vector.shape_cast %41 : vector<16x128xf32> to vector<1x16x128xf32>
    tpu.vector_store %arg8[%c0_17, %c0_18, %c0_19], %44 {strides = array<i32>} : memref<1x16x128xf32, #tpu.memory_space<vmem>>, vector<1x16x128xf32>,
    %c0_20 = arith.constant 0 : index
    %c0_21 = arith.constant 0 : index
    %c0_22 = arith.constant 0 : index
    %45 = vector.load %arg3[%c0_20, %c0_21, %c0_22] : memref<1x16x128xf32, #tpu.memory_space<vmem>>, vector<1x16x128xf32>
    %46 = vector.shape_cast %45 : vector<1x16x128xf32> to vector<16x128xf32>
    %47 = vector.extract_strided_slice %38 {offsets = [0, 128], sizes = [16, 128], strides = [1, 1]} : vector<16x256xf32> to vector<16x128xf32>
    %48 = arith.addf %46, %47 : vector<16x128xf32>
    %c0_23 = arith.constant 0 : index
    %c0_24 = arith.constant 0 : index
    %c0_25 = arith.constant 0 : index
    %49 = vector.load %arg9[%c0_23, %c0_24, %c0_25] : memref<1x16x128xf32, #tpu.memory_space<vmem>>, vector<1x16x128xf32>
    %50 = vector.shape_cast %49 : vector<1x16x128xf32> to vector<16x128xf32>
    %51 = vector.shape_cast %48 : vector<16x128xf32> to vector<1x16x128xf32>
    tpu.vector_store %arg9[%c0_23, %c0_24, %c0_25], %51 {strides = array<i32>} : memref<1x16x128xf32, #tpu.memory_space<vmem>>, vector<1x16x128xf32>,
    return
  }
  func.func @transform_1(%arg0: i32, %arg1: i32) -> (i32, i32, i32) {
    %c0_i32 = arith.constant 0 : i32
    %c0_i32_0 = arith.constant 0 : i32
    return %arg0, %arg1, %c0_i32 : i32, i32, i32
  }
  func.func @transform_2(%arg0: i32, %arg1: i32) -> (i32, i32) {
    %c0_i32 = arith.constant 0 : i32
    %c0_i32_0 = arith.constant 0 : i32
    %c0_i32_1 = arith.constant 0 : i32
    return %c0_i32, %c0_i32_0 : i32, i32
  }
  func.func @transform_3(%arg0: i32, %arg1: i32) -> (i32, i32) {
    %c0_i32 = arith.constant 0 : i32
    %c0_i32_0 = arith.constant 0 : i32
    %c0_i32_1 = arith.constant 0 : i32
    return %c0_i32, %c0_i32_0 : i32, i32
  }
  func.func @transform_4(%arg0: i32, %arg1: i32) -> (i32, i32) {
    %c0_i32 = arith.constant 0 : i32
    %c0_i32_0 = arith.constant 0 : i32
    %c0_i32_1 = arith.constant 0 : i32
    return %c0_i32, %c0_i32_0 : i32, i32
  }
  func.func @transform_5(%arg0: i32, %arg1: i32) -> (i32, i32) {
    %c0_i32 = arith.constant 0 : i32
    %c0_i32_0 = arith.constant 0 : i32
    %c0_i32_1 = arith.constant 0 : i32
    return %c0_i32, %c0_i32_0 : i32, i32
  }
  func.func @transform_6(%arg0: i32, %arg1: i32) -> (i32, i32, i32) {
    %c0_i32 = arith.constant 0 : i32
    %c0_i32_0 = arith.constant 0 : i32
    return %arg0, %arg1, %c0_i32 : i32, i32, i32
  }
  func.func @transform_7(%arg0: i32, %arg1: i32) -> (i32, i32, i32) {
    %c0_i32 = arith.constant 0 : i32
    %c0_i32_0 = arith.constant 0 : i32
    return %arg0, %arg1, %c0_i32 : i32, i32, i32
  }
}

</mosaic_0001>

<llo_original>
// kernel: tpu_custom_call.1
$region0: #{tpu_custom_call.1}
  #allocation0 [shape = 'u32[]', space=smem, size = 0x4, offset = 0x4, fixed_abs, tag = 'smem constant byte address 0x4 - core index']
  #allocation1 [shape = 'u32[72,128]{1,0:T(1,128)}', space=vmem, size = 0x9000, scoped, tag = 'internal scratch']
  #allocation2 [shape = 'f32[2,20,128]{2,1,0:T(8,128)}', space=vmem, size = 0x6000, scoped, tag = 'scratch operand']
  #allocation3 [shape = 's32[2]{0}', space=sflag, size = 0x8, scoped, tag = 'scratch operand']
  #allocation12 [shape = 's32[]', space=sflag, size = 0x4, offset = 0, fixed_abs, tag = 'sflag constant byte address 0x0 - dummy sync flag']
  #allocation13 [shape = 's32[]', space=sflag, size = 0x4, offset = 0, fixed_abs, tag = 'sflag constant byte address 0x0 - dummy sync flag']
  %s0 = inlined_call_operand.vmem [shape: f32[2,20,128], index: 0, kind: input, shape index: {}]
  %s1 = inlined_call_operand.vmem [shape: f32[2,16,128], index: 1, kind: input, shape index: {}]
  %s2 = inlined_call_operand.hbm [shape: bf16[384,256], index: 2, kind: input, shape index: {}]
  %s3 = inlined_call_operand.vmem [shape: f32[1,256], index: 3, kind: input, shape index: {}]
  %s4 = inlined_call_operand.hbm [shape: bf16[128,256], index: 4, kind: input, shape index: {}]
  %s5 = inlined_call_operand.vmem [shape: f32[1,256], index: 5, kind: input, shape index: {}]
  %s6 = inlined_call_operand.hbm [shape: f32[2,16,128], index: 6, kind: output, shape index: {0}]
  %s7 = inlined_call_operand.hbm [shape: f32[2,16,128], index: 7, kind: output, shape index: {1}]
  %8 = xla_tuple %s6, %s7
  %s9 = sld [smem:[#allocation0]]
  $region121: #{tpu_custom_call.1} parent=0
    _
  %s11 = ssub.s32 1, %s9
  %s12 = scalar_select 0, %s11, %s9
  $region1: #{tpu_custom_call.1} parent=0
    #allocation4 [shape = 'u8[196608]{0}', space=vmem, size = 0x30000, scoped, tag = 'input window, operand 2, single buffered']
    #allocation5 [shape = 's32[2]{0}', space=sflag, size = 0x8, scoped, tag = 'scoped memory for tpu_custom_call.1']
    #allocation6 [shape = 's32[2]{0}', space=sflag, size = 0x8, scoped, tag = 'scoped memory for tpu_custom_call.1']
    #allocation7 [shape = 'u8[65536]{0}', space=vmem, size = 0x10000, scoped, tag = 'input window, operand 4, single buffered']
    #allocation8 [shape = 's32[1]{0}', space=sflag, size = 0x4, scoped, tag = 'scoped memory for tpu_custom_call.1']
    #allocation9 [shape = 'u8[16384]{0}', space=vmem, size = 0x4000, scoped, tag = 'output window, operand 0']
    #allocation10 [shape = 'u8[16384]{0}', space=vmem, size = 0x4000, scoped, tag = 'output window, operand 1']
    #allocation11 [shape = 's32[2]{0}', space=sflag, size = 0x8, scoped, tag = 'scoped memory for tpu_custom_call.1']
    %13 = vsyncpa [#allocation5], 0
    %14 = vsyncpa [#allocation8], 0
    %15 = vsyncpa [#allocation6], 0
    %s16 = scalar_lea.sflag [#allocation6], 1
    %17 = vsyncpa %s16, 0
    %18 = vsyncpa [#allocation11], 0
    %s19 = scalar_lea.sflag [#allocation11], 1
    %20 = vsyncpa %s19, 0
    loop: start=0, step=1, limit=4
    $region2: #{tpu_custom_call.1} parent=1 // loop_pre_header
      _
    $region3: #{tpu_custom_call.1} parent=1 // loop_header
      %s22 = sphi 0, %s26
      %p23 = scmp.ge.s32.totalorder %s22, 4
      %s29 = sphi 0, %s41
      %s30 = sphi 0, %s37
      %s31 = sphi 0, %s29
      %s32 = sphi 0, %s30
      %s33 = sphi 0, %s31
      %s34 = sphi 0, %s32
      %s46 = sphi 0, %s48
      %s49 = sphi 0, %s46
      %s50 = sphi 0, %s49
      %s66 = sphi 0, %s50
      %s70 = sphi 0, %s70
      %s72 = sphi 0, %s70
      %s73 = sphi 0, %s72
      %s87 = sphi 0, %s73
      %s91 = sphi 0, %s91
      %s93 = sphi 0, %s91
      %s94 = sphi 0, %s93
      %s108 = sphi 0, %s94
      %s112 = sphi 0, %s112
      %s114 = sphi 0, %s112
      %s115 = sphi 0, %s114
      %s129 = sphi 0, %s115
      %s133 = sphi 0, %s133
      %s135 = sphi 0, %s133
      %s136 = sphi 0, %s135
      %s150 = sphi 0, %s136
      %s158 = sphi 0, %s160
      %s161 = sphi 0, %s158
      %s162 = sphi 0, %s161
      %s178 = sphi 0, %s162
      %s186 = sphi 0, %s188
      %s189 = sphi 0, %s186
      %s190 = sphi 0, %s189
      %s206 = sphi 0, %s190
    $region4: #{tpu_custom_call.1} parent=1 // loop_header_branch
      %25 = sbr.rel (%p23) target = $region8
    $region5: #{tpu_custom_call.1} parent=1 // loop_body
      %s27 = ssub.s32 %s22, 1
      %s28 = ssub.s32 %s22, 2
      %s35 = sadd.s32 1, %s30
      %p36 = scmp.ge.s32.totalorder %s35, 1
      %s37 = scalar_select %p36, 0, %s35
      %s38 = sadd.s32 1, %s29
      %s39 = scalar_select %p36, %s38, %s29
      %p40 = scmp.ge.s32.totalorder %s39, 2
      %s41 = scalar_select %p40, 0, %s39
      %s42 = ssub.s32 %s29, %s41
      %s43 = ssub.s32 %s30, %s37
      %s44 = sor.u32 %s42, %s43
      %p45 = scmp.eq.s32.totalorder %s44, 0
      %s47 = sadd.s32 %s46, 1
      %s48 = scalar_select %p45, %s46, %s47
      %p51 = pneg %p45
      %p52 = scmp.eq.s32.totalorder %s22, 1
      %p53 = por %p51, %p52
      %p54 = scmp.ne.s32.totalorder %s46, %s49
      %p55 = scmp.eq.s32.totalorder %s22, 0
      %p56 = por %p54, %p55
      %p57 = scmp.ne.s32.totalorder %s46, %s49
      %p58 = scmp.eq.s32.totalorder %s27, 1
      %p59 = por %p57, %p58
      %p60 = scmp.ne.s32.totalorder %s49, %s50
      %p61 = scmp.eq.s32.totalorder %s27, 0
      %p62 = por %p60, %p61
      %p63 = scmp.ne.s32.totalorder %s49, %s50
      %p64 = scmp.eq.s32.totalorder %s28, 1
      %p65 = por %p63, %p64
      %p67 = scmp.ne.s32.totalorder %s50, %s66
      %p68 = scmp.eq.s32.totalorder %s28, 0
      %p69 = por %p67, %p68
      %s71 = sadd.s32 %s70, 1
      %p74 = scmp.eq.s32.totalorder %s22, 1
      %p75 = scmp.ne.s32.totalorder %s70, %s72
      %p76 = scmp.eq.s32.totalorder %s22, 0
      %p77 = por %p75, %p76
      %p78 = scmp.ne.s32.totalorder %s70, %s72
      %p79 = scmp.eq.s32.totalorder %s27, 1
      %p80 = por %p78, %p79
      %p81 = scmp.ne.s32.totalorder %s72, %s73
      %p82 = scmp.eq.s32.totalorder %s27, 0
      %p83 = por %p81, %p82
      %p84 = scmp.ne.s32.totalorder %s72, %s73
      %p85 = scmp.eq.s32.totalorder %s28, 1
      %p86 = por %p84, %p85
      %p88 = scmp.ne.s32.totalorder %s73, %s87
      %p89 = scmp.eq.s32.totalorder %s28, 0
      %p90 = por %p88, %p89
      %s92 = sadd.s32 %s91, 1
      %p95 = scmp.eq.s32.totalorder %s22, 1
      %p96 = scmp.ne.s32.totalorder %s91, %s93
      %p97 = scmp.eq.s32.totalorder %s22, 0
      %p98 = por %p96, %p97
      %p99 = scmp.ne.s32.totalorder %s91, %s93
      %p100 = scmp.eq.s32.totalorder %s27, 1
      %p101 = por %p99, %p100
      %p102 = scmp.ne.s32.totalorder %s93, %s94
      %p103 = scmp.eq.s32.totalorder %s27, 0
      %p104 = por %p102, %p103
      %p105 = scmp.ne.s32.totalorder %s93, %s94
      %p106 = scmp.eq.s32.totalorder %s28, 1
      %p107 = por %p105, %p106
      %p109 = scmp.ne.s32.totalorder %s94, %s108
      %p110 = scmp.eq.s32.totalorder %s28, 0
      %p111 = por %p109, %p110
      %s113 = sadd.s32 %s112, 1
      %p116 = scmp.eq.s32.totalorder %s22, 1
      %p117 = scmp.ne.s32.totalorder %s112, %s114
      %p118 = scmp.eq.s32.totalorder %s22, 0
      %p119 = por %p117, %p118
      %p120 = scmp.ne.s32.totalorder %s112, %s114
      %p121 = scmp.eq.s32.totalorder %s27, 1
      %p122 = por %p120, %p121
      %p123 = scmp.ne.s32.totalorder %s114, %s115
      %p124 = scmp.eq.s32.totalorder %s27, 0
      %p125 = por %p123, %p124
      %p126 = scmp.ne.s32.totalorder %s114, %s115
      %p127 = scmp.eq.s32.totalorder %s28, 1
      %p128 = por %p126, %p127
      %p130 = scmp.ne.s32.totalorder %s115, %s129
      %p131 = scmp.eq.s32.totalorder %s28, 0
      %p132 = por %p130, %p131
      %s134 = sadd.s32 %s133, 1
      %p137 = scmp.eq.s32.totalorder %s22, 1
      %p138 = scmp.ne.s32.totalorder %s133, %s135
      %p139 = scmp.eq.s32.totalorder %s22, 0
      %p140 = por %p138, %p139
      %p141 = scmp.ne.s32.totalorder %s133, %s135
      %p142 = scmp.eq.s32.totalorder %s27, 1
      %p143 = por %p141, %p142
      %p144 = scmp.ne.s32.totalorder %s135, %s136
      %p145 = scmp.eq.s32.totalorder %s27, 0
      %p146 = por %p144, %p145
      %p147 = scmp.ne.s32.totalorder %s135, %s136
      %p148 = scmp.eq.s32.totalorder %s28, 1
      %p149 = por %p147, %p148
      %p151 = scmp.ne.s32.totalorder %s136, %s150
      %p152 = scmp.eq.s32.totalorder %s28, 0
      %p153 = por %p151, %p152
      %s154 = ssub.s32 %s29, %s41
      %s155 = ssub.s32 %s30, %s37
      %s156 = sor.u32 %s154, %s155
      %p157 = scmp.eq.s32.totalorder %s156, 0
      %s159 = sadd.s32 %s158, 1
      %s160 = scalar_select %p157, %s158, %s159
      %p163 = pneg %p157
      %p164 = scmp.eq.s32.totalorder %s22, 1
      %p165 = por %p163, %p164
      %p166 = scmp.ne.s32.totalorder %s158, %s161
      %p167 = scmp.eq.s32.totalorder %s22, 0
      %p168 = por %p166, %p167
      %p169 = scmp.ne.s32.totalorder %s158, %s161
      %p170 = scmp.eq.s32.totalorder %s27, 1
      %p171 = por %p169, %p170
      %p172 = scmp.ne.s32.totalorder %s161, %s162
      %p173 = scmp.eq.s32.totalorder %s27, 0
      %p174 = por %p172, %p173
      %p175 = scmp.ne.s32.totalorder %s161, %s162
      %p176 = scmp.eq.s32.totalorder %s28, 1
      %p177 = por %p175, %p176
      %p179 = scmp.ne.s32.totalorder %s162, %s178
      %p180 = scmp.eq.s32.totalorder %s28, 0
      %p181 = por %p179, %p180
      %s182 = ssub.s32 %s29, %s41
      %s183 = ssub.s32 %s30, %s37
      %s184 = sor.u32 %s182, %s183
      %p185 = scmp.eq.s32.totalorder %s184, 0
      %s187 = sadd.s32 %s186, 1
      %s188 = scalar_select %p185, %s186, %s187
      %p191 = pneg %p185
      %p192 = scmp.eq.s32.totalorder %s22, 1
      %p193 = por %p191, %p192
      %p194 = scmp.ne.s32.totalorder %s186, %s189
      %p195 = scmp.eq.s32.totalorder %s22, 0
      %p196 = por %p194, %p195
      %p197 = scmp.ne.s32.totalorder %s186, %s189
      %p198 = scmp.eq.s32.totalorder %s27, 1
      %p199 = por %p197, %p198
      %p200 = scmp.ne.s32.totalorder %s189, %s190
      %p201 = scmp.eq.s32.totalorder %s27, 0
      %p202 = por %p200, %p201
      %p203 = scmp.ne.s32.totalorder %s189, %s190
      %p204 = scmp.eq.s32.totalorder %s28, 1
      %p205 = por %p203, %p204
      %p207 = scmp.ne.s32.totalorder %s190, %s206
      %p208 = scmp.eq.s32.totalorder %s28, 0
      %p209 = por %p207, %p208
      %p210 = scmp.le.s32.totalorder 1, %s22
      %p211 = scmp.lt.s32.totalorder %s22, 3
      %p212 = pnand %p210, %p211
      %p213 = pneg %p212
      // Predicated region
      $region9: #{tpu_custom_call.1} parent=5 // pred_check
        _
      $region10: #{tpu_custom_call.1} parent=5 // pred_check_branch
        %215 = sbr.rel (%p212) target = $region12
      $region11: #{tpu_custom_call.1} parent=5 // pred_region
        %s216 = ssub.s32 %s22, 1
        // Predicated region
        $region13: #{tpu_custom_call.1} parent=11 // pred_check
          %p217 = pneg %p83
        $region14: #{tpu_custom_call.1} parent=11 // pred_check_branch
          %219 = sbr.rel (%p217) target = $region16
        $region15: #{tpu_custom_call.1} parent=11 // pred_region
          %221 = vsyncadd [#allocation5], 0
          %s222 = sshll.u32 %s2, 4
          %s223 = int_to_ptr.hbm [resolvable:$true] %s222
          %s224 = sshll.u32 [#allocation4], 4
          %s225 = int_to_ptr.vmem [resolvable:$true] %s224
          %230 = dma.hbm_to_vmem [thread:$0]  %s223, 6144, %s225, [#allocation5], 128, 128, 8
        $region16: #{tpu_custom_call.1} parent=11 // pred_fallthru
          _
        // Predicated region
        $region17: #{tpu_custom_call.1} parent=11 // pred_check
          %p231 = pneg %p104
        $region18: #{tpu_custom_call.1} parent=11 // pred_check_branch
          %233 = sbr.rel (%p231) target = $region20
        $region19: #{tpu_custom_call.1} parent=11 // pred_region
          _
        $region20: #{tpu_custom_call.1} parent=11 // pred_fallthru
          _
        // Predicated region
        $region21: #{tpu_custom_call.1} parent=11 // pred_check
          %p234 = pneg %p125
        $region22: #{tpu_custom_call.1} parent=11 // pred_check_branch
          %236 = sbr.rel (%p234) target = $region24
        $region23: #{tpu_custom_call.1} parent=11 // pred_region
          %238 = vsyncadd [#allocation8], 0
          %s239 = sshll.u32 %s4, 4
          %s240 = int_to_ptr.hbm [resolvable:$true] %s239
          %s241 = sshll.u32 [#allocation7], 4
          %s242 = int_to_ptr.vmem [resolvable:$true] %s241
          %247 = dma.hbm_to_vmem [thread:$0]  %s240, 2048, %s242, [#allocation8], 128, 128, 8
        $region24: #{tpu_custom_call.1} parent=11 // pred_fallthru
          _
        // Predicated region
        $region25: #{tpu_custom_call.1} parent=11 // pred_check
          %p248 = pneg %p146
        $region26: #{tpu_custom_call.1} parent=11 // pred_check_branch
          %250 = sbr.rel (%p248) target = $region28
        $region27: #{tpu_custom_call.1} parent=11 // pred_region
          _
        $region28: #{tpu_custom_call.1} parent=11 // pred_fallthru
          _
      $region12: #{tpu_custom_call.1} parent=5 // pred_fallthru
        _
      %p251 = scmp.lt.s32.totalorder %s22, 2
      // Predicated region
      $region29: #{tpu_custom_call.1} parent=5 // pred_check
        %p252 = pneg %p251
      $region30: #{tpu_custom_call.1} parent=5 // pred_check_branch
        %254 = sbr.rel (%p252) target = $region32
      $region31: #{tpu_custom_call.1} parent=5 // pred_region
        // Predicated region
        $region33: #{tpu_custom_call.1} parent=31 // pred_check
          %p255 = pneg %p56
        $region34: #{tpu_custom_call.1} parent=31 // pred_check_branch
          %257 = sbr.rel (%p255) target = $region36
        $region35: #{tpu_custom_call.1} parent=31 // pred_region
          %s258 = smul.u32 2, %s30
          %p259 = scmp.lt.s32.totalorder %s29, 1
          %s260 = scalar_select %p259, %s29, 1
          %p261 = scmp.lt.s32.totalorder %s258, 1
          %s262 = scalar_select %p261, %s258, 1
          %s263 = smul.addr %s260, 2
          %s264 = sadd.s32 %s262, %s263
          %s265 = smul.addr %s264, 8
          %s266 = scalar_lea.vmem %s1, %s265
          %s267 = smul.u32 2, %s30
        $region36: #{tpu_custom_call.1} parent=31 // pred_fallthru
          _
      $region32: #{tpu_custom_call.1} parent=5 // pred_fallthru
        _
      %p268 = scmp.le.s32.totalorder 1, %s22
      %p269 = scmp.lt.s32.totalorder %s22, 3
      %p270 = pnand %p268, %p269
      %p271 = pneg %p270
      // Predicated region
      $region37: #{tpu_custom_call.1} parent=5 // pred_check
        _
      $region38: #{tpu_custom_call.1} parent=5 // pred_check_branch
        %273 = sbr.rel (%p270) target = $region40
      $region39: #{tpu_custom_call.1} parent=5 // pred_region
        %s274 = ssub.s32 %s22, 1
        // Predicated region
        $region41: #{tpu_custom_call.1} parent=39 // pred_check
          %p275 = pneg %p83
        $region42: #{tpu_custom_call.1} parent=39 // pred_check_branch
          %277 = sbr.rel (%p275) target = $region44
        $region43: #{tpu_custom_call.1} parent=39 // pred_region
          %279 = dma.done [#allocation5], 6144
        $region44: #{tpu_custom_call.1} parent=39 // pred_fallthru
          _
        // Predicated region
        $region45: #{tpu_custom_call.1} parent=39 // pred_check
          %p280 = pneg %p125
        $region46: #{tpu_custom_call.1} parent=39 // pred_check_branch
          %282 = sbr.rel (%p280) target = $region48
        $region47: #{tpu_custom_call.1} parent=39 // pred_region
          %284 = dma.done [#allocation8], 2048
        $region48: #{tpu_custom_call.1} parent=39 // pred_fallthru
          _
        %s285 = smul.u32 2, %s32
        %p286 = scmp.lt.s32.totalorder %s31, 1
        %s287 = scalar_select %p286, %s31, 1
        %p288 = scmp.lt.s32.totalorder %s285, 1
        %s289 = scalar_select %p288, %s285, 1
        %s290 = smul.addr %s287, 2
        %s291 = sadd.s32 %s289, %s290
        %s292 = smul.addr %s291, 8
        %s293 = scalar_lea.vmem %s1, %s292
        %p294 = pneg %p62
        %p295 = pneg %p59
        %p296 = pneg %p83
        %p297 = pneg %p80
        %p298 = pneg %p104
        %p299 = pneg %p101
        %p300 = pneg %p125
        %p301 = pneg %p122
        %p302 = pneg %p146
        %p303 = pneg %p143
        %p304 = pneg %p174
        %p305 = pneg %p171
        %s306 = sand.u32 %s161, 1
        %s307 = scalar_lea.sflag [#allocation6], %s306
        %s308 = sand.u32 %s161, 1
        %s309 = smul.addr %s308, 16
        %s310 = scalar_lea.vmem [#allocation9], %s309
        %p311 = pneg %p202
        %p312 = pneg %p199
        %s313 = sand.u32 %s189, 1
        %s314 = scalar_lea.sflag [#allocation11], %s313
        %s315 = sand.u32 %s189, 1
        %s316 = smul.addr %s315, 16
        %s317 = scalar_lea.vmem [#allocation10], %s316
        %s318 = smul.u32 2, %s32
        %p319 = scmp.lt.s32.totalorder %s31, 1
        %s320 = scalar_select %p319, %s31, 1
        %p321 = scmp.lt.s32.totalorder %s318, 1
        %s322 = scalar_select %p321, %s318, 1
        %s323 = smul.addr %s320, 2
        %s324 = sadd.s32 %s322, %s323
        %s325 = smul.addr %s324, 8
        %s326 = scalar_lea.vmem %s1, %s325
        %s327 = smul.u32 2, %s32
        %s328 = smul.u32 2, %s32
        %s329 = smul.u32 2, %s32
        %s330 = sand.u32 %s32, 1
        %p331 = scmp.eq.s32.totalorder %s32, 0
        // Predicated region
        $region49: #{tpu_custom_call.1} parent=39 // pred_check
          %p332 = pneg %p331
        $region50: #{tpu_custom_call.1} parent=39 // pred_check_branch
          %334 = sbr.rel (%p332) target = $region52
        $region51: #{tpu_custom_call.1} parent=39 // pred_region
          %s335 = smul.u32 %s31, 24
          %s336 = sadd.s32 0, %s335
          %s337 = scalar_lea.vmem %s0, %s336
          // Predicated region
          $region53: #{tpu_custom_call.1} parent=51 // pred_check
            _
          $region54: #{tpu_custom_call.1} parent=51 // pred_check_branch
            %339 = sbr.rel (0) target = $region56
          $region55: #{tpu_custom_call.1} parent=51 // pred_region
            %s340 = scalar_lea.vmem %s337, 16
            %s341 = scalar_lea.vmem [#allocation2], 16
            loop: start=0, step=1, limit=1
            $region57: #{tpu_custom_call.1} parent=55 // loop_pre_header
              _
            $region58: #{tpu_custom_call.1} parent=55 // loop_header
              %s343 = sphi 0, %s347
              %p344 = scmp.ge.s32.totalorder %s343, 1
              %s348 = sphi %s337, %s337
              %s349 = sphi [#allocation2], [#allocation2]
            $region59: #{tpu_custom_call.1} parent=55 // loop_header_branch
              %346 = sbr.rel (%p344) target = $region63
            $region60: #{tpu_custom_call.1} parent=55 // loop_body
              %v350 = vld [vmem:[%s348] sm:$0xff]
              %351 = vst [vmem:[%s349] sm:$0xff] %v350
              %v352 = vld [vmem:[%s348 + $0x8] sm:$0xff]
              %353 = vst [vmem:[%s349 + $0x8] sm:$0xff] %v352
            $region61: #{tpu_custom_call.1} parent=55 // loop_footer
              %s347 = sadd.s32 1, %s343
            $region62: #{tpu_custom_call.1} parent=55 // loop_footer_branch
              %342 = sbr.rel target = $region58
            $region63: #{tpu_custom_call.1} parent=55 // loop_exit
              _
            %s355 = ssub.s32 16, 1
            loop: start=0, step=1, limit=1
            $region64: #{tpu_custom_call.1} parent=55 // loop_pre_header
              _
            $region65: #{tpu_custom_call.1} parent=55 // loop_header
              %s357 = sphi 0, %s361
              %p358 = scmp.ge.s32.totalorder %s357, 1
              %s362 = sphi %s340, %s340
              %s363 = sphi %s341, %s341
            $region66: #{tpu_custom_call.1} parent=55 // loop_header_branch
              %360 = sbr.rel (%p358) target = $region70
            $region67: #{tpu_custom_call.1} parent=55 // loop_body
              %v364 = vld [vmem:[%s362] sm:%s355]
              %365 = vst [vmem:[%s363] sm:%s355] %v364
            $region68: #{tpu_custom_call.1} parent=55 // loop_footer
              %s361 = sadd.s32 1, %s357
            $region69: #{tpu_custom_call.1} parent=55 // loop_footer_branch
              %356 = sbr.rel target = $region65
            $region70: #{tpu_custom_call.1} parent=55 // loop_exit
              _
          $region56: #{tpu_custom_call.1} parent=51 // pred_fallthru
            _
          // Predicated region
          $region71: #{tpu_custom_call.1} parent=51 // pred_check
            _
          $region72: #{tpu_custom_call.1} parent=51 // pred_check_branch
            %368 = sbr.rel (0) target = $region74
          $region73: #{tpu_custom_call.1} parent=51 // pred_region
            %369 = vsyncadd [#allocation3], 320
          $region74: #{tpu_custom_call.1} parent=51 // pred_fallthru
            _
        $region52: #{tpu_custom_call.1} parent=39 // pred_fallthru
          _
        %s370 = sadd.s32 %s32, 1
        %p371 = scmp.lt.s32.totalorder %s370, 1
        // Predicated region
        $region75: #{tpu_custom_call.1} parent=39 // pred_check
          %p372 = pneg %p371
        $region76: #{tpu_custom_call.1} parent=39 // pred_check_branch
          %374 = sbr.rel (%p372) target = $region78
        $region77: #{tpu_custom_call.1} parent=39 // pred_region
          %s375 = ssub.s32 1, %s330
          %s376 = smul.u32 %s370, 16
          %s377 = smul.u32 %s31, 24
          %s378 = sadd.s32 %s376, %s377
          %s379 = scalar_lea.vmem %s0, %s378
          %s380 = smul.u32 %s375, 24
          %s381 = scalar_lea.vmem [#allocation2], %s380
          %s382 = scalar_lea.sflag [#allocation3], %s375
          // Predicated region
          $region79: #{tpu_custom_call.1} parent=77 // pred_check
            _
          $region80: #{tpu_custom_call.1} parent=77 // pred_check_branch
            %384 = sbr.rel (0) target = $region82
          $region81: #{tpu_custom_call.1} parent=77 // pred_region
            %s385 = scalar_lea.vmem %s379, 16
            %s386 = scalar_lea.vmem %s381, 16 [#allocation2]
            loop: start=0, step=1, limit=1
            $region83: #{tpu_custom_call.1} parent=81 // loop_pre_header
              _
            $region84: #{tpu_custom_call.1} parent=81 // loop_header
              %s388 = sphi 0, %s392
              %p389 = scmp.ge.s32.totalorder %s388, 1
              %s393 = sphi %s379, %s379
              %s394 = sphi %s381, %s381
            $region85: #{tpu_custom_call.1} parent=81 // loop_header_branch
              %391 = sbr.rel (%p389) target = $region89
            $region86: #{tpu_custom_call.1} parent=81 // loop_body
              %v395 = vld [vmem:[%s393] sm:$0xff]
              %396 = vst [vmem:[%s394] sm:$0xff] %v395
              %v397 = vld [vmem:[%s393 + $0x8] sm:$0xff]
              %398 = vst [vmem:[%s394 + $0x8] sm:$0xff] %v397
            $region87: #{tpu_custom_call.1} parent=81 // loop_footer
              %s392 = sadd.s32 1, %s388
            $region88: #{tpu_custom_call.1} parent=81 // loop_footer_branch
              %387 = sbr.rel target = $region84
            $region89: #{tpu_custom_call.1} parent=81 // loop_exit
              _
            %s400 = ssub.s32 16, 1
            loop: start=0, step=1, limit=1
            $region90: #{tpu_custom_call.1} parent=81 // loop_pre_header
              _
            $region91: #{tpu_custom_call.1} parent=81 // loop_header
              %s402 = sphi 0, %s406
              %p403 = scmp.ge.s32.totalorder %s402, 1
              %s407 = sphi %s385, %s385
              %s408 = sphi %s386, %s386
            $region92: #{tpu_custom_call.1} parent=81 // loop_header_branch
              %405 = sbr.rel (%p403) target = $region96
            $region93: #{tpu_custom_call.1} parent=81 // loop_body
              %v409 = vld [vmem:[%s407] sm:%s400]
              %410 = vst [vmem:[%s408] sm:%s400] %v409
            $region94: #{tpu_custom_call.1} parent=81 // loop_footer
              %s406 = sadd.s32 1, %s402
            $region95: #{tpu_custom_call.1} parent=81 // loop_footer_branch
              %401 = sbr.rel target = $region91
            $region96: #{tpu_custom_call.1} parent=81 // loop_exit
              _
          $region82: #{tpu_custom_call.1} parent=77 // pred_fallthru
            _
          // Predicated region
          $region97: #{tpu_custom_call.1} parent=77 // pred_check
            _
          $region98: #{tpu_custom_call.1} parent=77 // pred_check_branch
            %413 = sbr.rel (0) target = $region100
          $region99: #{tpu_custom_call.1} parent=77 // pred_region
            %414 = vsyncadd %s382, 320
          $region100: #{tpu_custom_call.1} parent=77 // pred_fallthru
            _
        $region78: #{tpu_custom_call.1} parent=39 // pred_fallthru
          _
        %s415 = smul.u32 %s32, 16
        %s416 = smul.u32 %s330, 24
        %s417 = scalar_lea.vmem [#allocation2], %s416
        %s418 = scalar_lea.sflag [#allocation3], %s330
        %s419 = smul.u32 20, 1
        %s420 = sshll.u32 %s419, 4
        %421 = dma.done %s418, %s420
        %v422 = vld [vmem:[%s417] sm:$0xff]
        %v423 = vld [vmem:[%s417 + $0x8] sm:$0xff]
        %v424 = vld [vmem:[%s417 + $0x10] sm:$0xf]
        %v425 = vpack.c.bf16 %v422, %v422
        %v426 = vpack.c.bf16 %v423, %v423
        %v427 = vpack.c.bf16 %v424, %v424
        %v430 = vunpack.c.l.b16 %v425
        %v431 = vunpack.c.l.b16 %v426
        %v432 = vpack.c.b16 %v431, %v430
        %v435 = vunpack.c.l.b16 %v427
        %v436 = vpack.c.b16 %v435, %v435
        %vm437 = vcmask 1046528
        %v438 = vrot.slane %v432, 1
        %v439 = vrot.slane %v436, 1
        %v440 = vsel %vm437, %v438, %v439
        %vm442 = vcmask 1045504
        %v443 = vrot.slane %v432, 2
        %v444 = vrot.slane %v436, 2
        %v445 = vsel %vm442, %v443, %v444
        %v447 = vld [vmem:[#allocation4] sm:$0xff]
        %v448 = vld [vmem:[#allocation4 + $0x8] sm:$0xff]
        %v449 = vld [vmem:[#allocation4 + $0x10] sm:$0xff]
        %v450 = vld [vmem:[#allocation4 + $0x18] sm:$0xff]
        %v451 = vld [vmem:[#allocation4 + $0x20] sm:$0xff]
        %v452 = vld [vmem:[#allocation4 + $0x28] sm:$0xff]
        %v453 = vld [vmem:[#allocation4 + $0x30] sm:$0xff]
        %v454 = vld [vmem:[#allocation4 + $0x38] sm:$0xff]
        %v455 = vld [vmem:[#allocation4 + $0x40] sm:$0xff]
        %v456 = vld [vmem:[#allocation4 + $0x48] sm:$0xff]
        %v457 = vld [vmem:[#allocation4 + $0x50] sm:$0xff]
        %v458 = vld [vmem:[#allocation4 + $0x58] sm:$0xff]
        %v459 = vld [vmem:[#allocation4 + $0x60] sm:$0xff]
        %v460 = vld [vmem:[#allocation4 + $0x68] sm:$0xff]
        %v461 = vld [vmem:[#allocation4 + $0x70] sm:$0xff]
        %v462 = vld [vmem:[#allocation4 + $0x78] sm:$0xff]
        %v463 = vld [vmem:[#allocation4 + $0x80] sm:$0xff]
        %v464 = vld [vmem:[#allocation4 + $0x88] sm:$0xff]
        %v465 = vld [vmem:[#allocation4 + $0x90] sm:$0xff]
        %v466 = vld [vmem:[#allocation4 + $0x98] sm:$0xff]
        %v467 = vld [vmem:[#allocation4 + $0xa0] sm:$0xff]
        %v468 = vld [vmem:[#allocation4 + $0xa8] sm:$0xff]
        %v469 = vld [vmem:[#allocation4 + $0xb0] sm:$0xff]
        %v470 = vld [vmem:[#allocation4 + $0xb8] sm:$0xff]
        %v471 = vld [vmem:[#allocation4 + $0xc0] sm:$0xff]
        %v472 = vld [vmem:[#allocation4 + $0xc8] sm:$0xff]
        %v473 = vld [vmem:[#allocation4 + $0xd0] sm:$0xff]
        %v474 = vld [vmem:[#allocation4 + $0xd8] sm:$0xff]
        %v475 = vld [vmem:[#allocation4 + $0xe0] sm:$0xff]
        %v476 = vld [vmem:[#allocation4 + $0xe8] sm:$0xff]
        %v477 = vld [vmem:[#allocation4 + $0xf0] sm:$0xff]
        %v478 = vld [vmem:[#allocation4 + $0xf8] sm:$0xff]
        %v479 = vld [vmem:[#allocation4 + $0x100] sm:$0xff]
        %v480 = vld [vmem:[#allocation4 + $0x108] sm:$0xff]
        %v481 = vld [vmem:[#allocation4 + $0x110] sm:$0xff]
        %v482 = vld [vmem:[#allocation4 + $0x118] sm:$0xff]
        %v483 = vld [vmem:[#allocation4 + $0x120] sm:$0xff]
        %v484 = vld [vmem:[#allocation4 + $0x128] sm:$0xff]
        %v485 = vld [vmem:[#allocation4 + $0x130] sm:$0xff]
        %v486 = vld [vmem:[#allocation4 + $0x138] sm:$0xff]
        %v487 = vld [vmem:[#allocation4 + $0x140] sm:$0xff]
        %v488 = vld [vmem:[#allocation4 + $0x148] sm:$0xff]
        %v489 = vld [vmem:[#allocation4 + $0x150] sm:$0xff]
        %v490 = vld [vmem:[#allocation4 + $0x158] sm:$0xff]
        %v491 = vld [vmem:[#allocation4 + $0x160] sm:$0xff]
        %v492 = vld [vmem:[#allocation4 + $0x168] sm:$0xff]
        %v493 = vld [vmem:[#allocation4 + $0x170] sm:$0xff]
        %v494 = vld [vmem:[#allocation4 + $0x178] sm:$0xff]
        %v495 = vld [vmem:[%s3] sm:$0x3]
        %v497 = vperm.slane %v495, 0
        %v498 = vperm.slane %v495, 1
        %v549 = vunpack.c.l.b16 %v447
        %v550 = vunpack.c.h.b16 %v447
        %v551 = vunpack.c.l.b16 %v448
        %v552 = vunpack.c.h.b16 %v448
        %v553 = vunpack.c.l.b16 %v449
        %v554 = vunpack.c.h.b16 %v449
        %v555 = vunpack.c.l.b16 %v450
        %v556 = vunpack.c.h.b16 %v450
        %v557 = vunpack.c.l.b16 %v451
        %v558 = vunpack.c.h.b16 %v451
        %v559 = vunpack.c.l.b16 %v452
        %v560 = vunpack.c.h.b16 %v452
        %v561 = vunpack.c.l.b16 %v453
        %v562 = vunpack.c.h.b16 %v453
        %v563 = vunpack.c.l.b16 %v454
        %v564 = vunpack.c.h.b16 %v454
        %v565 = vunpack.c.l.b16 %v455
        %v566 = vunpack.c.h.b16 %v455
        %v567 = vunpack.c.l.b16 %v456
        %v568 = vunpack.c.h.b16 %v456
        %v569 = vunpack.c.l.b16 %v457
        %v570 = vunpack.c.h.b16 %v457
        %v571 = vunpack.c.l.b16 %v458
        %v572 = vunpack.c.h.b16 %v458
        %v573 = vunpack.c.l.b16 %v459
        %v574 = vunpack.c.h.b16 %v459
        %v575 = vunpack.c.l.b16 %v460
        %v576 = vunpack.c.h.b16 %v460
        %v577 = vunpack.c.l.b16 %v461
        %v578 = vunpack.c.h.b16 %v461
        %v579 = vunpack.c.l.b16 %v462
        %v580 = vunpack.c.h.b16 %v462
        %v581 = vunpack.c.l.b16 %v463
        %v582 = vunpack.c.h.b16 %v463
        %v583 = vunpack.c.l.b16 %v464
        %v584 = vunpack.c.h.b16 %v464
        %v585 = vunpack.c.l.b16 %v465
        %v586 = vunpack.c.h.b16 %v465
        %v587 = vunpack.c.l.b16 %v466
        %v588 = vunpack.c.h.b16 %v466
        %v589 = vunpack.c.l.b16 %v467
        %v590 = vunpack.c.h.b16 %v467
        %v591 = vunpack.c.l.b16 %v468
        %v592 = vunpack.c.h.b16 %v468
        %v593 = vunpack.c.l.b16 %v469
        %v594 = vunpack.c.h.b16 %v469
        %v595 = vunpack.c.l.b16 %v470
        %v596 = vunpack.c.h.b16 %v470
        %v597 = vunpack.c.l.b16 %v471
        %v598 = vunpack.c.h.b16 %v471
        %v599 = vunpack.c.l.b16 %v472
        %v600 = vunpack.c.h.b16 %v472
        %v601 = vunpack.c.l.b16 %v473
        %v602 = vunpack.c.h.b16 %v473
        %v603 = vunpack.c.l.b16 %v474
        %v604 = vunpack.c.h.b16 %v474
        %v605 = vunpack.c.l.b16 %v475
        %v606 = vunpack.c.h.b16 %v475
        %v607 = vunpack.c.l.b16 %v476
        %v608 = vunpack.c.h.b16 %v476
        %v609 = vunpack.c.l.b16 %v477
        %v610 = vunpack.c.h.b16 %v477
        %v611 = vunpack.c.l.b16 %v478
        %v612 = vunpack.c.h.b16 %v478
        %v613 = vunpack.c.l.b16 %v479
        %v614 = vunpack.c.h.b16 %v479
        %v615 = vunpack.c.l.b16 %v480
        %v616 = vunpack.c.h.b16 %v480
        %v617 = vunpack.c.l.b16 %v481
        %v618 = vunpack.c.h.b16 %v481
        %v619 = vunpack.c.l.b16 %v482
        %v620 = vunpack.c.h.b16 %v482
        %v621 = vunpack.c.l.b16 %v483
        %v622 = vunpack.c.h.b16 %v483
        %v623 = vunpack.c.l.b16 %v484
        %v624 = vunpack.c.h.b16 %v484
        %v625 = vunpack.c.l.b16 %v485
        %v626 = vunpack.c.h.b16 %v485
        %v627 = vunpack.c.l.b16 %v486
        %v628 = vunpack.c.h.b16 %v486
        %v629 = vunpack.c.l.b16 %v487
        %v630 = vunpack.c.h.b16 %v487
        %v631 = vunpack.c.l.b16 %v488
        %v632 = vunpack.c.h.b16 %v488
        %v633 = vunpack.c.l.b16 %v489
        %v634 = vunpack.c.h.b16 %v489
        %v635 = vunpack.c.l.b16 %v490
        %v636 = vunpack.c.h.b16 %v490
        %v637 = vunpack.c.l.b16 %v491
        %v638 = vunpack.c.h.b16 %v491
        %v639 = vunpack.c.l.b16 %v492
        %v640 = vunpack.c.h.b16 %v492
        %v641 = vunpack.c.l.b16 %v493
        %v642 = vunpack.c.h.b16 %v493
        %v643 = vunpack.c.l.b16 %v494
        %v644 = vunpack.c.h.b16 %v494
        %v645 = vpack.c.b16 %v551, %v549
        %v646 = vpack.c.b16 %v552, %v550
        %v647 = vpack.c.b16 %v555, %v553
        %v648 = vpack.c.b16 %v556, %v554
        %v649 = vpack.c.b16 %v559, %v557
        %v650 = vpack.c.b16 %v560, %v558
        %v651 = vpack.c.b16 %v563, %v561
        %v652 = vpack.c.b16 %v564, %v562
        %v653 = vpack.c.b16 %v567, %v565
        %v654 = vpack.c.b16 %v568, %v566
        %v655 = vpack.c.b16 %v571, %v569
        %v656 = vpack.c.b16 %v572, %v570
        %v657 = vpack.c.b16 %v575, %v573
        %v658 = vpack.c.b16 %v576, %v574
        %v659 = vpack.c.b16 %v579, %v577
        %v660 = vpack.c.b16 %v580, %v578
        %v661 = vpack.c.b16 %v583, %v581
        %v662 = vpack.c.b16 %v584, %v582
        %v663 = vpack.c.b16 %v587, %v585
        %v664 = vpack.c.b16 %v588, %v586
        %v665 = vpack.c.b16 %v591, %v589
        %v666 = vpack.c.b16 %v592, %v590
        %v667 = vpack.c.b16 %v595, %v593
        %v668 = vpack.c.b16 %v596, %v594
        %v669 = vpack.c.b16 %v599, %v597
        %v670 = vpack.c.b16 %v600, %v598
        %v671 = vpack.c.b16 %v603, %v601
        %v672 = vpack.c.b16 %v604, %v602
        %v673 = vpack.c.b16 %v607, %v605
        %v674 = vpack.c.b16 %v608, %v606
        %v675 = vpack.c.b16 %v611, %v609
        %v676 = vpack.c.b16 %v612, %v610
        %v677 = vpack.c.b16 %v615, %v613
        %v678 = vpack.c.b16 %v616, %v614
        %v679 = vpack.c.b16 %v619, %v617
        %v680 = vpack.c.b16 %v620, %v618
        %v681 = vpack.c.b16 %v623, %v621
        %v682 = vpack.c.b16 %v624, %v622
        %v683 = vpack.c.b16 %v627, %v625
        %v684 = vpack.c.b16 %v628, %v626
        %v685 = vpack.c.b16 %v631, %v629
        %v686 = vpack.c.b16 %v632, %v630
        %v687 = vpack.c.b16 %v635, %v633
        %v688 = vpack.c.b16 %v636, %v634
        %v689 = vpack.c.b16 %v639, %v637
        %v690 = vpack.c.b16 %v640, %v638
        %v691 = vpack.c.b16 %v643, %v641
        %v692 = vpack.c.b16 %v644, %v642
        %741 = vmatpush.bf16.msra.mxu0 %v659
        %742 = vmatpush.bf16.msra.mxu0 %v657
        %743 = vmatpush.bf16.msra.mxu0 %v655
        %744 = vmatpush.bf16.msra.mxu0 %v653
        %745 = vmatpush.bf16.msra.mxu0 %v651
        %746 = vmatpush.bf16.msra.mxu0 %v649
        %747 = vmatpush.bf16.msra.mxu0 %v647
        %748 = vmatpush.bf16.msra.mxu0 %v645
        %749 = vmatmul.bf16.gmra.mxu0 %v432
        %v750 = vpop.f32.mrf.mxu0
        %v751 = vadd.f32 %v497, %v750
        %v752 = vpop.f32.mrf.mxu0
        %v753 = vadd.f32 %v497, %v752
        %754 = vdwg.mxu0
        %755 = vmatpush.bf16.msra.mxu0 %v675
        %756 = vmatpush.bf16.msra.mxu0 %v673
        %757 = vmatpush.bf16.msra.mxu0 %v671
        %758 = vmatpush.bf16.msra.mxu0 %v669
        %759 = vmatpush.bf16.msra.mxu0 %v667
        %760 = vmatpush.bf16.msra.mxu0 %v665
        %761 = vmatpush.bf16.msra.mxu0 %v663
        %762 = vmatpush.bf16.msra.mxu0 %v661
        %763 = vmatmul.bf16.gmra.mxu0 %v440
        %v764 = vpop.f32.mrf.mxu0
        %v765 = vadd.f32 %v751, %v764
        %v766 = vpop.f32.mrf.mxu0
        %v767 = vadd.f32 %v753, %v766
        %768 = vdwg.mxu0
        %769 = vmatpush.bf16.msra.mxu0 %v691
        %770 = vmatpush.bf16.msra.mxu0 %v689
        %771 = vmatpush.bf16.msra.mxu0 %v687
        %772 = vmatpush.bf16.msra.mxu0 %v685
        %773 = vmatpush.bf16.msra.mxu0 %v683
        %774 = vmatpush.bf16.msra.mxu0 %v681
        %775 = vmatpush.bf16.msra.mxu0 %v679
        %776 = vmatpush.bf16.msra.mxu0 %v677
        %777 = vmatmul.bf16.gmra.mxu0 %v445
        %v778 = vpop.f32.mrf.mxu0
        %v779 = vadd.f32 %v765, %v778
        %v780 = vpop.f32.mrf.mxu0
        %v781 = vadd.f32 %v767, %v780
        %782 = vdwg.mxu0
        %783 = vmatpush.bf16.msra.mxu0 %v660
        %784 = vmatpush.bf16.msra.mxu0 %v658
        %785 = vmatpush.bf16.msra.mxu0 %v656
        %786 = vmatpush.bf16.msra.mxu0 %v654
        %787 = vmatpush.bf16.msra.mxu0 %v652
        %788 = vmatpush.bf16.msra.mxu0 %v650
        %789 = vmatpush.bf16.msra.mxu0 %v648
        %790 = vmatpush.bf16.msra.mxu0 %v646
        %791 = vmatmul.bf16.gmra.mxu0 %v432
        %v792 = vpop.f32.mrf.mxu0
        %v793 = vadd.f32 %v498, %v792
        %v794 = vpop.f32.mrf.mxu0
        %v795 = vadd.f32 %v498, %v794
        %796 = vdwg.mxu0
        %797 = vmatpush.bf16.msra.mxu0 %v676
        %798 = vmatpush.bf16.msra.mxu0 %v674
        %799 = vmatpush.bf16.msra.mxu0 %v672
        %800 = vmatpush.bf16.msra.mxu0 %v670
        %801 = vmatpush.bf16.msra.mxu0 %v668
        %802 = vmatpush.bf16.msra.mxu0 %v666
        %803 = vmatpush.bf16.msra.mxu0 %v664
        %804 = vmatpush.bf16.msra.mxu0 %v662
        %805 = vmatmul.bf16.gmra.mxu0 %v440
        %v806 = vpop.f32.mrf.mxu0
        %v807 = vadd.f32 %v793, %v806
        %v808 = vpop.f32.mrf.mxu0
        %v809 = vadd.f32 %v795, %v808
        %810 = vdwg.mxu0
        %811 = vmatpush.bf16.msra.mxu0 %v692
        %812 = vmatpush.bf16.msra.mxu0 %v690
        %813 = vmatpush.bf16.msra.mxu0 %v688
        %814 = vmatpush.bf16.msra.mxu0 %v686
        %815 = vmatpush.bf16.msra.mxu0 %v684
        %816 = vmatpush.bf16.msra.mxu0 %v682
        %817 = vmatpush.bf16.msra.mxu0 %v680
        %818 = vmatpush.bf16.msra.mxu0 %v678
        %819 = vmatmul.bf16.gmra.mxu0 %v445
        %v820 = vpop.f32.mrf.mxu0
        %v821 = vadd.f32 %v807, %v820
        %v822 = vpop.f32.mrf.mxu0
        %v823 = vadd.f32 %v809, %v822
        %824 = vdwg.mxu0
        %v825 = vtanh.pop %v779
        %v826 = vtanh.pop %v821
        %v827 = vtanh.pop %v781
        %v828 = vtanh.pop %v823
        %v829 = vmul.f32 %v825, %v826
        %v830 = vmul.f32 %v827, %v828
        %v831 = vpack.c.bf16 %v830, %v829
        %v832 = vld [vmem:[#allocation7] sm:$0xff]
        %v833 = vld [vmem:[#allocation7 + $0x8] sm:$0xff]
        %v834 = vld [vmem:[#allocation7 + $0x10] sm:$0xff]
        %v835 = vld [vmem:[#allocation7 + $0x18] sm:$0xff]
        %v836 = vld [vmem:[#allocation7 + $0x20] sm:$0xff]
        %v837 = vld [vmem:[#allocation7 + $0x28] sm:$0xff]
        %v838 = vld [vmem:[#allocation7 + $0x30] sm:$0xff]
        %v839 = vld [vmem:[#allocation7 + $0x38] sm:$0xff]
        %v840 = vld [vmem:[#allocation7 + $0x40] sm:$0xff]
        %v841 = vld [vmem:[#allocation7 + $0x48] sm:$0xff]
        %v842 = vld [vmem:[#allocation7 + $0x50] sm:$0xff]
        %v843 = vld [vmem:[#allocation7 + $0x58] sm:$0xff]
        %v844 = vld [vmem:[#allocation7 + $0x60] sm:$0xff]
        %v845 = vld [vmem:[#allocation7 + $0x68] sm:$0xff]
        %v846 = vld [vmem:[#allocation7 + $0x70] sm:$0xff]
        %v847 = vld [vmem:[#allocation7 + $0x78] sm:$0xff]
        %v848 = vld [vmem:[%s5] sm:$0x3]
        %v850 = vperm.slane %v848, 0
        %v851 = vperm.slane %v848, 1
        %v870 = vunpack.c.l.b16 %v832
        %v871 = vunpack.c.h.b16 %v832
        %v872 = vunpack.c.l.b16 %v833
        %v873 = vunpack.c.h.b16 %v833
        %v874 = vunpack.c.l.b16 %v834
        %v875 = vunpack.c.h.b16 %v834
        %v876 = vunpack.c.l.b16 %v835
        %v877 = vunpack.c.h.b16 %v835
        %v878 = vunpack.c.l.b16 %v836
        %v879 = vunpack.c.h.b16 %v836
        %v880 = vunpack.c.l.b16 %v837
        %v881 = vunpack.c.h.b16 %v837
        %v882 = vunpack.c.l.b16 %v838
        %v883 = vunpack.c.h.b16 %v838
        %v884 = vunpack.c.l.b16 %v839
        %v885 = vunpack.c.h.b16 %v839
        %v886 = vunpack.c.l.b16 %v840
        %v887 = vunpack.c.h.b16 %v840
        %v888 = vunpack.c.l.b16 %v841
        %v889 = vunpack.c.h.b16 %v841
        %v890 = vunpack.c.l.b16 %v842
        %v891 = vunpack.c.h.b16 %v842
        %v892 = vunpack.c.l.b16 %v843
        %v893 = vunpack.c.h.b16 %v843
        %v894 = vunpack.c.l.b16 %v844
        %v895 = vunpack.c.h.b16 %v844
        %v896 = vunpack.c.l.b16 %v845
        %v897 = vunpack.c.h.b16 %v845
        %v898 = vunpack.c.l.b16 %v846
        %v899 = vunpack.c.h.b16 %v846
        %v900 = vunpack.c.l.b16 %v847
        %v901 = vunpack.c.h.b16 %v847
        %v902 = vpack.c.b16 %v872, %v870
        %v903 = vpack.c.b16 %v873, %v871
        %v904 = vpack.c.b16 %v876, %v874
        %v905 = vpack.c.b16 %v877, %v875
        %v906 = vpack.c.b16 %v880, %v878
        %v907 = vpack.c.b16 %v881, %v879
        %v908 = vpack.c.b16 %v884, %v882
        %v909 = vpack.c.b16 %v885, %v883
        %v910 = vpack.c.b16 %v888, %v886
        %v911 = vpack.c.b16 %v889, %v887
        %v912 = vpack.c.b16 %v892, %v890
        %v913 = vpack.c.b16 %v893, %v891
        %v914 = vpack.c.b16 %v896, %v894
        %v915 = vpack.c.b16 %v897, %v895
        %v916 = vpack.c.b16 %v900, %v898
        %v917 = vpack.c.b16 %v901, %v899
        %934 = vmatpush.bf16.msra.mxu0 %v916
        %935 = vmatpush.bf16.msra.mxu0 %v914
        %936 = vmatpush.bf16.msra.mxu0 %v912
        %937 = vmatpush.bf16.msra.mxu0 %v910
        %938 = vmatpush.bf16.msra.mxu0 %v908
        %939 = vmatpush.bf16.msra.mxu0 %v906
        %940 = vmatpush.bf16.msra.mxu0 %v904
        %941 = vmatpush.bf16.msra.mxu0 %v902
        %942 = vmatmul.bf16.gmra.mxu0 %v831
        %v943 = vpop.f32.mrf.mxu0
        %v944 = vadd.f32 %v850, %v943
        %v945 = vpop.f32.mrf.mxu0
        %v946 = vadd.f32 %v850, %v945
        %947 = vdwg.mxu0
        %948 = vmatpush.bf16.msra.mxu0 %v917
        %949 = vmatpush.bf16.msra.mxu0 %v915
        %950 = vmatpush.bf16.msra.mxu0 %v913
        %951 = vmatpush.bf16.msra.mxu0 %v911
        %952 = vmatpush.bf16.msra.mxu0 %v909
        %953 = vmatpush.bf16.msra.mxu0 %v907
        %954 = vmatpush.bf16.msra.mxu0 %v905
        %955 = vmatpush.bf16.msra.mxu0 %v903
        %956 = vmatmul.bf16.gmra.mxu0 %v831
        %v957 = vpop.f32.mrf.mxu0
        %v958 = vadd.f32 %v851, %v957
        %v959 = vpop.f32.mrf.mxu0
        %v960 = vadd.f32 %v851, %v959
        %961 = vdwg.mxu0
        %vm964 = vcmask 1041408
        %v965 = vrot.slane %v944, 6
        %v966 = vrot.slane %v946, 6
        %v967 = vsel %vm964, %v965, %v966
        %v971 = vadd.f32 %v422, %v965
        %v972 = vadd.f32 %v423, %v967
        %v973 = vadd.f32 %v424, %v966
        %974 = vst [vmem:[%s310 - $0x2] sm:$0xfc] %v971
        %975 = vst [vmem:[%s310 + $0x6] sm:$0xff] %v972
        %976 = vst [vmem:[%s310 + $0xe] sm:$0x3] %v973
        %v977 = vld [vmem:[%s326] sm:$0xff]
        %v978 = vld [vmem:[%s326 + $0x8] sm:$0xff]
        %v979 = vadd.f32 %v977, %v958
        %v980 = vadd.f32 %v978, %v960
        %981 = vst [vmem:[%s317] sm:$0xff] %v979
        %982 = vst [vmem:[%s317 + $0x8] sm:$0xff] %v980
        %s983 = sand.u32 %s161, 1
        %s984 = scalar_lea.sflag [#allocation6], %s983
        %s985 = sand.u32 %s161, 1
        %s986 = smul.addr %s985, 16
        %s987 = scalar_lea.vmem [#allocation9], %s986
        %s988 = sand.u32 %s189, 1
        %s989 = scalar_lea.sflag [#allocation11], %s988
        %s990 = sand.u32 %s189, 1
        %s991 = smul.addr %s990, 16
        %s992 = scalar_lea.vmem [#allocation10], %s991
        // Predicated region
        $region101: #{tpu_custom_call.1} parent=39 // pred_check
          %p993 = pneg %p171
        $region102: #{tpu_custom_call.1} parent=39 // pred_check_branch
          %995 = sbr.rel (%p993) target = $region104
        $region103: #{tpu_custom_call.1} parent=39 // pred_region
          %s996 = smul.u32 2, %s32
          %998 = vsyncadd %s984, 0
          %s999 = smul.addr %s31, 2
          %s1000 = sadd.s32 %s996, %s999
          %s1001 = smul.addr %s1000, 8
          %s1002 = scalar_lea.hbm %s6, %s1001
          %s1003 = sshll.u32 %s987, 4
          %s1004 = int_to_ptr.vmem [resolvable:$true] %s1003
          %s1005 = sshll.u32 %s1002, 4
          %s1006 = int_to_ptr.hbm [resolvable:$true] %s1005
          %1011 = dma.vmem_to_hbm [thread:$0]  %s1004, 256, %s1006, %s984, 128, 128, 8
        $region104: #{tpu_custom_call.1} parent=39 // pred_fallthru
          _
        // Predicated region
        $region105: #{tpu_custom_call.1} parent=39 // pred_check
          %p1012 = pneg %p199
        $region106: #{tpu_custom_call.1} parent=39 // pred_check_branch
          %1014 = sbr.rel (%p1012) target = $region108
        $region107: #{tpu_custom_call.1} parent=39 // pred_region
          %s1015 = smul.u32 2, %s32
          %1017 = vsyncadd %s989, 0
          %s1018 = smul.addr %s31, 2
          %s1019 = sadd.s32 %s1015, %s1018
          %s1020 = smul.addr %s1019, 8
          %s1021 = scalar_lea.hbm %s7, %s1020
          %s1022 = sshll.u32 %s992, 4
          %s1023 = int_to_ptr.vmem [resolvable:$true] %s1022
          %s1024 = sshll.u32 %s1021, 4
          %s1025 = int_to_ptr.hbm [resolvable:$true] %s1024
          %1030 = dma.vmem_to_hbm [thread:$0]  %s1023, 256, %s1025, %s989, 128, 128, 8
        $region108: #{tpu_custom_call.1} parent=39 // pred_fallthru
          _
      $region40: #{tpu_custom_call.1} parent=5 // pred_fallthru
        _
      %p1031 = scmp.le.s32.totalorder 2, %s22
      // Predicated region
      $region109: #{tpu_custom_call.1} parent=5 // pred_check
        %p1032 = pneg %p1031
      $region110: #{tpu_custom_call.1} parent=5 // pred_check_branch
        %1034 = sbr.rel (%p1032) target = $region112
      $region111: #{tpu_custom_call.1} parent=5 // pred_region
        %s1035 = ssub.s32 %s22, 2
        // Predicated region
        $region113: #{tpu_custom_call.1} parent=111 // pred_check
          %p1036 = pneg %p177
        $region114: #{tpu_custom_call.1} parent=111 // pred_check_branch
          %1038 = sbr.rel (%p1036) target = $region116
        $region115: #{tpu_custom_call.1} parent=111 // pred_region
          %s1039 = sand.u32 %s162, 1
          %s1040 = scalar_lea.sflag [#allocation6], %s1039
          %s1041 = sand.u32 %s162, 1
          %s1042 = smul.addr %s1041, 16
          %s1043 = scalar_lea.vmem [#allocation9], %s1042
          %1045 = dma.done %s1040, 256
        $region116: #{tpu_custom_call.1} parent=111 // pred_fallthru
          _
        // Predicated region
        $region117: #{tpu_custom_call.1} parent=111 // pred_check
          %p1046 = pneg %p205
        $region118: #{tpu_custom_call.1} parent=111 // pred_check_branch
          %1048 = sbr.rel (%p1046) target = $region120
        $region119: #{tpu_custom_call.1} parent=111 // pred_region
          %s1049 = sand.u32 %s190, 1
          %s1050 = scalar_lea.sflag [#allocation11], %s1049
          %s1051 = sand.u32 %s190, 1
          %s1052 = smul.addr %s1051, 16
          %s1053 = scalar_lea.vmem [#allocation10], %s1052
          %1055 = dma.done %s1050, 256
        $region120: #{tpu_custom_call.1} parent=111 // pred_fallthru
          _
      $region112: #{tpu_custom_call.1} parent=5 // pred_fallthru
        _
    $region6: #{tpu_custom_call.1} parent=1 // loop_footer
      %s26 = sadd.s32 1, %s22
    $region7: #{tpu_custom_call.1} parent=1 // loop_footer_branch
      %21 = sbr.rel target = $region3
    $region8: #{tpu_custom_call.1} parent=1 // loop_exit
      _
    %1056 = vsyncpa [#allocation5], 1
    %s1057 = scalar_lea.sflag [#allocation5], 1
    %1058 = vsyncpa %s1057, 1
    %1059 = vsyncpa [#allocation8], 1
    %1060 = vsyncpa [#allocation6], 1
    %s1061 = scalar_lea.sflag [#allocation6], 1
    %1062 = vsyncpa %s1061, 1
    %1063 = vsyncpa [#allocation11], 1
    %s1064 = scalar_lea.sflag [#allocation11], 1
    %1065 = vsyncpa %s1064, 1
  %1066 = vsyncmov [#allocation3]
  %s1067 = vpop.sfrf %1066
  %p1068 = scmp.eq.s32.totalorder %s1067, 0
  %p1069 = pneg %p1068
  %1071 = shalt.err (%p1069)
  %s1072 = scalar_lea.sflag [#allocation3], 1
  %1073 = vsyncmov %s1072
  %s1074 = vpop.sfrf %1073
  %p1075 = scmp.eq.s32.totalorder %s1074, 0
  %p1076 = pneg %p1075
  %1078 = shalt.err (%p1076)

</llo_original>
